<compile_context>
chip_gen: v6e
topology: v6e:2x2x1
jax: 0.10.0
libtpu: 0.0.40
codegen_flags: <defaults>
</compile_context>

<pallas_src>
import jax
import jax.numpy as jnp
from jax.experimental import pallas as pl
from jax.experimental.pallas import tpu as pltpu

_LANE = 128  # TPU vreg lane width


def _round_up(n, m):
    return ((n + m - 1) // m) * m


def _leaky_relu(x, negative_slope=0.01):
    return jnp.where(x > 0, x, negative_slope * x)


def ppo_cnet_kernel(inv_mean_ref, x_ref, w1_ref, wpk_ref, b_ref, o_ref):
    """One batch tile.

    inv_mean_ref : SMEM (1,)           precomputed 1 / mean(s) (global scalar)
    x_ref        : VMEM (TB, in_f)     batch tile of inputs
    w1_ref       : VMEM (in_f, W)      fc1 weight (resident)
    wpk_ref      : VMEM (3, W, W)      fc2 / fc3 / out weights, padded & packed (resident)
    b_ref        : VMEM (4, W)         fc1 / fc2 / fc3 / out biases, padded & packed (resident)
    o_ref        : VMEM (TB, W)        lane-dense padded output tile
    """
    # Global-mean normalization (scalar lives in SMEM; no per-tile XLU reduce).
    x = x_ref[...] * inv_mean_ref[0]

    # fc1 + leaky_relu
    h = jnp.dot(x, w1_ref[...], preferred_element_type=jnp.float32) + b_ref[0:1, :]
    h = _leaky_relu(h)

    # fc2 + leaky_relu
    h = jnp.dot(h, wpk_ref[0], preferred_element_type=jnp.float32) + b_ref[1:2, :]
    h = _leaky_relu(h)

    # fc3 + leaky_relu
    h = jnp.dot(h, wpk_ref[1], preferred_element_type=jnp.float32) + b_ref[2:3, :]
    h = _leaky_relu(h)

    # output layer (no activation); padded columns are exactly zero.
    out = jnp.dot(h, wpk_ref[2], preferred_element_type=jnp.float32) + b_ref[3:4, :]
    o_ref[...] = out.astype(o_ref.dtype)


def pack_params(p):
    """Pad hidden/output widths to the 128-lane vreg width and collapse the 8
    weight/bias arrays into 3 contiguous buffers (fewer DMA descriptors)."""
    in_f, h1 = p["w1"].shape
    h2 = p["w2"].shape[1]
    out_f = p["wo"].shape[1]
    W = _round_up(max(h1, h2, out_f), _LANE)

    def pad2(a, rows, cols):
        return jnp.pad(a, ((0, rows - a.shape[0]), (0, cols - a.shape[1])))

    w1p = pad2(p["w1"], in_f, W)                                      # (in_f, W)
    wpk = jnp.stack([pad2(p["w2"], W, W),                             # (3, W, W)
                     pad2(p["w3"], W, W),
                     pad2(p["wo"], W, W)])
    bpk = jnp.concatenate([pad2(p["b1"], 1, W), pad2(p["b2"], 1, W),  # (4, W)
                           pad2(p["b3"], 1, W), pad2(p["bo"], 1, W)], axis=0)
    return {"w1": w1p, "wpk": wpk, "b": bpk, "out_features": out_f}


def ppo_cnet_forward(x, packed, *, tile_b=512):
    """x: (B, in_features) float32. packed: output of pack_params()."""
    B, in_f = x.shape
    W = packed["w1"].shape[1]
    out_f = packed["out_features"]

    # Global mean over ALL elements (PyTorch `torch.mean(s)` semantics),
    # computed once on the original (unpadded) input.
    inv_mean = (1.0 / jnp.mean(x)).reshape((1,)).astype(jnp.float32)

    # Batch tile: multiple of the f32 sublane (8); pad B up to a whole grid.
    tb = _round_up(min(tile_b, _round_up(B, 8)), 8)
    Bp = _round_up(B, tb)
    if Bp != B:
        x = jnp.pad(x, ((0, Bp - B), (0, 0)))

    out = pl.pallas_call(
        ppo_cnet_kernel,
        out_shape=jax.ShapeDtypeStruct((Bp, W), jnp.float32),
        grid=(Bp // tb,),
        in_specs=[
            pl.BlockSpec(memory_space=pltpu.MemorySpace.SMEM),   # inv_mean scalar
            pl.BlockSpec((tb, in_f), lambda i: (i, 0)),          # x: streamed batch tiles
            pl.BlockSpec((in_f, W), lambda i: (0, 0)),           # w1: resident
            pl.BlockSpec((3, W, W), lambda i: (0, 0, 0)),        # w2/w3/wo: resident
            pl.BlockSpec((4, W), lambda i: (0, 0)),              # biases: resident
        ],
        out_specs=pl.BlockSpec((tb, W), lambda i: (i, 0)),       # lane-dense output tiles
        compiler_params=pltpu.CompilerParams(
            dimension_semantics=("parallel",),                   # 2-TC sharding on v7x
        ),
    )(inv_mean, x, packed["w1"], packed["wpk"], packed["b"])

    # Drop batch padding and the zero-padded output lanes.
    return out[:B, :out_f]


def init_params(key, in_features, out_features, hidden_1=128, hidden_2=64):
    """Deterministic init mirroring the PyTorch module:
       weights ~ N(0, 0.1); biases use PyTorch Linear default U(-1/sqrt(fan_in), +1/sqrt(fan_in)).
       Weights stored transposed as (in_dim, out_dim) so the kernel computes x @ W."""
    ks = jax.random.split(key, 8)

    def w(k, fan_in, fan_out):
        return (0.1 * jax.random.normal(k, (fan_in, fan_out))).astype(jnp.float32)

    def b(k, fan_in, fan_out):
        bound = 1.0 / jnp.sqrt(jnp.float32(fan_in))
        return jax.random.uniform(k, (1, fan_out), minval=-bound, maxval=bound).astype(jnp.float32)

    return {
        "w1": w(ks[0], in_features, hidden_1), "b1": b(ks[1], in_features, hidden_1),
        "w2": w(ks[2], hidden_1, hidden_2),    "b2": b(ks[3], hidden_1, hidden_2),
        "w3": w(ks[4], hidden_2, hidden_2),    "b3": b(ks[5], hidden_2, hidden_2),
        "wo": w(ks[6], hidden_2, out_features),"bo": b(ks[7], hidden_2, out_features),
    }


def reference_forward(x, p):
    """Pure-JAX reference of the PyTorch forward, for verification."""
    h = x / jnp.mean(x)
    h = _leaky_relu(h @ p["w1"] + p["b1"])
    h = _leaky_relu(h @ p["w2"] + p["b2"])
    h = _leaky_relu(h @ p["w3"] + p["b3"])
    return h @ p["wo"] + p["bo"]


if __name__ == "__main__":
    in_features = 32
    out_features = 8
    batch = 512      # amortize launch/DMA overhead: many samples per pallas_call

    key = jax.random.PRNGKey(0)
    k_params, k_x = jax.random.split(key)

    params = init_params(k_params, in_features, out_features)
    # Keep inputs positive-ish so mean(s) is safely nonzero (state features).
    x = jax.random.uniform(k_x, (batch, in_features), minval=0.1, maxval=1.0).astype(jnp.float32)

    packed = pack_params(params)                 # pad/pack once, reuse every call
    out = ppo_cnet_forward(x, packed, tile_b=128)  # 4 batch tiles -> exercises the grid
    out = jax.block_until_ready(out)

    ref = reference_forward(x, params)
    assert out.shape == (batch, out_features)
    assert jnp.allclose(out, ref, atol=1e-3, rtol=1e-3), "Pallas output mismatch vs reference"

    print("KERNEL_OK")
</pallas_src>

<mosaic_0001>
module attributes {stable_mosaic.version = 11 : i64} {
  func.func @ppo_cnet_kernel(%arg0: i32, %arg1: memref<1xf32, #tpu.memory_space<smem>>, %arg2: memref<128x32xf32, #tpu.memory_space<vmem>>, %arg3: memref<32x128xf32, #tpu.memory_space<vmem>>, %arg4: memref<3x128x128xf32, #tpu.memory_space<vmem>>, %arg5: memref<4x128xf32, #tpu.memory_space<vmem>>, %arg6: memref<128x128xf32, #tpu.memory_space<vmem>>) attributes {dimension_semantics = [#tpu.dimension_semantics<parallel>], iteration_bounds = array<i64: 4>, scalar_prefetch = 0 : i64, scratch_operands = 0 : i64, tpu.core_type = #tpu.core_type<tc>, window_params = [{transform_indices = @transform_0, window_bounds = array<i64: 1>}, {transform_indices = @transform_1, window_bounds = array<i64: 128, 32>}, {pipeline_mode = #tpu.pipeline_mode<synchronous>, transform_indices = @transform_2, window_bounds = array<i64: 32, 128>}, {pipeline_mode = #tpu.pipeline_mode<synchronous>, transform_indices = @transform_3, window_bounds = array<i64: 3, 128, 128>}, {pipeline_mode = #tpu.pipeline_mode<synchronous>, transform_indices = @transform_4, window_bounds = array<i64: 4, 128>}, {transform_indices = @transform_5, window_bounds = array<i64: 128, 128>}]} {
    %c0 = arith.constant 0 : index
    %c0_0 = arith.constant 0 : index
    %0 = vector.load %arg2[%c0, %c0_0] : memref<128x32xf32, #tpu.memory_space<vmem>>, vector<128x32xf32>
    %c0_1 = arith.constant 0 : index
    %1 = memref.load %arg1[%c0_1] : memref<1xf32, #tpu.memory_space<smem>>
    %2 = vector.broadcast %1 : f32 to vector<128x32xf32>
    %3 = arith.mulf %0, %2 : vector<128x32xf32>
    %c0_2 = arith.constant 0 : index
    %c0_3 = arith.constant 0 : index
    %4 = vector.load %arg3[%c0_2, %c0_3] : memref<32x128xf32, #tpu.memory_space<vmem>>, vector<32x128xf32>
    %cst = arith.constant dense<0.000000e+00> : vector<128x128xf32>
    %5 = tpu.matmul %3, %4, %cst {dimension_numbers = #tpu.dot_dimension_numbers<[1], [0], [0], [1], [0, 0, 1, 1], [], []>} : vector<128x32xf32>, vector<32x128xf32>, vector<128x128xf32> -> vector<128x128xf32>
    %c0_4 = arith.constant 0 : index
    %c0_5 = arith.constant 0 : index
    %6 = vector.load %arg5[%c0_4, %c0_5] : memref<4x128xf32, #tpu.memory_space<vmem>>, vector<1x128xf32>
    %7 = vector.broadcast %6 : vector<1x128xf32> to vector<128x128xf32>
    %8 = arith.addf %5, %7 : vector<128x128xf32>
    %cst_6 = arith.constant 0.000000e+00 : f32
    %9 = vector.broadcast %cst_6 : f32 to vector<128x128xf32>
    %10 = arith.cmpf ogt, %8, %9 : vector<128x128xf32>
    %cst_7 = arith.constant 0.00999999977 : f32
    %11 = vector.broadcast %cst_7 : f32 to vector<128x128xf32>
    %12 = arith.mulf %11, %8 : vector<128x128xf32>
    %13 = arith.select %10, %8, %12 : vector<128x128xi1>, vector<128x128xf32>
    %c0_8 = arith.constant 0 : index
    %c0_9 = arith.constant 0 : index
    %c0_10 = arith.constant 0 : index
    %14 = vector.load %arg4[%c0_8, %c0_9, %c0_10] : memref<3x128x128xf32, #tpu.memory_space<vmem>>, vector<1x128x128xf32>
    %15 = vector.shape_cast %14 : vector<1x128x128xf32> to vector<128x128xf32>
    %cst_11 = arith.constant dense<0.000000e+00> : vector<128x128xf32>
    %16 = tpu.matmul %13, %15, %cst_11 {dimension_numbers = #tpu.dot_dimension_numbers<[1], [0], [0], [1], [0, 0, 1, 1], [], []>} : vector<128x128xf32>, vector<128x128xf32>, vector<128x128xf32> -> vector<128x128xf32>
    %c1 = arith.constant 1 : index
    %c0_12 = arith.constant 0 : index
    %17 = vector.load %arg5[%c1, %c0_12] : memref<4x128xf32, #tpu.memory_space<vmem>>, vector<1x128xf32>
    %18 = vector.broadcast %17 : vector<1x128xf32> to vector<128x128xf32>
    %19 = arith.addf %16, %18 : vector<128x128xf32>
    %cst_13 = arith.constant 0.000000e+00 : f32
    %20 = vector.broadcast %cst_13 : f32 to vector<128x128xf32>
    %21 = arith.cmpf ogt, %19, %20 : vector<128x128xf32>
    %cst_14 = arith.constant 0.00999999977 : f32
    %22 = vector.broadcast %cst_14 : f32 to vector<128x128xf32>
    %23 = arith.mulf %22, %19 : vector<128x128xf32>
    %24 = arith.select %21, %19, %23 : vector<128x128xi1>, vector<128x128xf32>
    %c1_15 = arith.constant 1 : index
    %c0_16 = arith.constant 0 : index
    %c0_17 = arith.constant 0 : index
    %25 = vector.load %arg4[%c1_15, %c0_16, %c0_17] : memref<3x128x128xf32, #tpu.memory_space<vmem>>, vector<1x128x128xf32>
    %26 = vector.shape_cast %25 : vector<1x128x128xf32> to vector<128x128xf32>
    %cst_18 = arith.constant dense<0.000000e+00> : vector<128x128xf32>
    %27 = tpu.matmul %24, %26, %cst_18 {dimension_numbers = #tpu.dot_dimension_numbers<[1], [0], [0], [1], [0, 0, 1, 1], [], []>} : vector<128x128xf32>, vector<128x128xf32>, vector<128x128xf32> -> vector<128x128xf32>
    %c2 = arith.constant 2 : index
    %c0_19 = arith.constant 0 : index
    %28 = vector.load %arg5[%c2, %c0_19] : memref<4x128xf32, #tpu.memory_space<vmem>>, vector<1x128xf32>
    %29 = vector.broadcast %28 : vector<1x128xf32> to vector<128x128xf32>
    %30 = arith.addf %27, %29 : vector<128x128xf32>
    %cst_20 = arith.constant 0.000000e+00 : f32
    %31 = vector.broadcast %cst_20 : f32 to vector<128x128xf32>
    %32 = arith.cmpf ogt, %30, %31 : vector<128x128xf32>
    %cst_21 = arith.constant 0.00999999977 : f32
    %33 = vector.broadcast %cst_21 : f32 to vector<128x128xf32>
    %34 = arith.mulf %33, %30 : vector<128x128xf32>
    %35 = arith.select %32, %30, %34 : vector<128x128xi1>, vector<128x128xf32>
    %c2_22 = arith.constant 2 : index
    %c0_23 = arith.constant 0 : index
    %c0_24 = arith.constant 0 : index
    %36 = vector.load %arg4[%c2_22, %c0_23, %c0_24] : memref<3x128x128xf32, #tpu.memory_space<vmem>>, vector<1x128x128xf32>
    %37 = vector.shape_cast %36 : vector<1x128x128xf32> to vector<128x128xf32>
    %cst_25 = arith.constant dense<0.000000e+00> : vector<128x128xf32>
    %38 = tpu.matmul %35, %37, %cst_25 {dimension_numbers = #tpu.dot_dimension_numbers<[1], [0], [0], [1], [0, 0, 1, 1], [], []>} : vector<128x128xf32>, vector<128x128xf32>, vector<128x128xf32> -> vector<128x128xf32>
    %c3 = arith.constant 3 : index
    %c0_26 = arith.constant 0 : index
    %39 = vector.load %arg5[%c3, %c0_26] : memref<4x128xf32, #tpu.memory_space<vmem>>, vector<1x128xf32>
    %40 = vector.broadcast %39 : vector<1x128xf32> to vector<128x128xf32>
    %41 = arith.addf %38, %40 : vector<128x128xf32>
    %c0_27 = arith.constant 0 : index
    %c0_28 = arith.constant 0 : index
    %42 = vector.load %arg6[%c0_27, %c0_28] : memref<128x128xf32, #tpu.memory_space<vmem>>, vector<128x128xf32>
    tpu.vector_store %arg6[%c0_27, %c0_28], %41 {strides = array<i32>} : memref<128x128xf32, #tpu.memory_space<vmem>>, vector<128x128xf32>,
    return
  }
  func.func @transform_0(%arg0: i32) -> i32 {
    %c0_i32 = arith.constant 0 : i32
    %c0_i32_0 = arith.constant 0 : i32
    return %c0_i32 : i32
  }
  func.func @transform_1(%arg0: i32) -> (i32, i32) {
    %c0_i32 = arith.constant 0 : i32
    %c0_i32_0 = arith.constant 0 : i32
    return %arg0, %c0_i32 : i32, i32
  }
  func.func @transform_2(%arg0: i32) -> (i32, i32) {
    %c0_i32 = arith.constant 0 : i32
    %c0_i32_0 = arith.constant 0 : i32
    %c0_i32_1 = arith.constant 0 : i32
    return %c0_i32, %c0_i32_0 : i32, i32
  }
  func.func @transform_3(%arg0: i32) -> (i32, i32, i32) {
    %c0_i32 = arith.constant 0 : i32
    %c0_i32_0 = arith.constant 0 : i32
    %c0_i32_1 = arith.constant 0 : i32
    %c0_i32_2 = arith.constant 0 : i32
    return %c0_i32, %c0_i32_0, %c0_i32_1 : i32, i32, i32
  }
  func.func @transform_4(%arg0: i32) -> (i32, i32) {
    %c0_i32 = arith.constant 0 : i32
    %c0_i32_0 = arith.constant 0 : i32
    %c0_i32_1 = arith.constant 0 : i32
    return %c0_i32, %c0_i32_0 : i32, i32
  }
  func.func @transform_5(%arg0: i32) -> (i32, i32) {
    %c0_i32 = arith.constant 0 : i32
    %c0_i32_0 = arith.constant 0 : i32
    return %arg0, %c0_i32 : i32, i32
  }
}

</mosaic_0001>

<llo_original>
// kernel: tpu_custom_call.1
$region0: #{tpu_custom_call.1}
  #allocation0 [shape = 'u32[]', space=smem, size = 0x4, offset = 0x4, fixed_abs, tag = 'smem constant byte address 0x4 - core index']
  #allocation1 [shape = 'u32[144,128]{1,0:T(1,128)}', space=vmem, size = 0x12000, scoped, tag = 'internal scratch']
  #allocation2 [shape = 'f32[1]{0:T(128)S(6)}', space=smem, size = 0x200, scoped, tag = 'scoped memory for tpu_custom_call.1']
  %s0 = inlined_call_operand.<no memory space> [shape: f32[1], index: 0, kind: input, shape index: {}]
  %s1 = inlined_call_operand.vmem [shape: f32[512,32], index: 1, kind: input, shape index: {}]
  %s2 = inlined_call_operand.vmem [shape: f32[32,128], index: 2, kind: input, shape index: {}]
  %s3 = inlined_call_operand.vmem [shape: f32[3,128,128], index: 3, kind: input, shape index: {}]
  %s4 = inlined_call_operand.vmem [shape: f32[4,128], index: 4, kind: input, shape index: {}]
  %s5 = inlined_call_operand.hbm [shape: f32[512,128], index: 5, kind: output, shape index: {}]
  %s6 = sld [smem:[#allocation0]]
  $region53: #{tpu_custom_call.1} parent=0
    _
  %s8 = ssub.s32 1, %s6
  %s9 = scalar_select 0, %s8, %s6
  %10 = sst [smem:[#allocation2]] %s0
  $region1: #{tpu_custom_call.1} parent=0
    #allocation3 [shape = 'u8[131072]{0}', space=vmem, size = 0x20000, scoped, tag = 'output window, operand 0']
    #allocation4 [shape = 's32[2]{0}', space=sflag, size = 0x8, scoped, tag = 'scoped memory for tpu_custom_call.1']
    %11 = vsyncpa [#allocation4], 0
    %s12 = scalar_lea.sflag [#allocation4], 1
    %13 = vsyncpa %s12, 0
    loop: start=0, step=1, limit=6
    $region2: #{tpu_custom_call.1} parent=1 // loop_pre_header
      _
    $region3: #{tpu_custom_call.1} parent=1 // loop_header
      %s15 = sphi 0, %s19
      %p16 = scmp.ge.s32.totalorder %s15, 6
      %s23 = sphi 0, %s23
      %s25 = sphi 0, %s23
      %s26 = sphi 0, %s25
      %s40 = sphi 0, %s26
      %s46 = sphi 0, %s48
      %s49 = sphi 0, %s46
      %s50 = sphi 0, %s49
      %s66 = sphi 0, %s50
      %s70 = sphi 0, %s70
      %s72 = sphi 0, %s70
      %s73 = sphi 0, %s72
      %s87 = sphi 0, %s73
      %s91 = sphi 0, %s91
      %s93 = sphi 0, %s91
      %s94 = sphi 0, %s93
      %s108 = sphi 0, %s94
      %s112 = sphi 0, %s112
      %s114 = sphi 0, %s112
      %s115 = sphi 0, %s114
      %s129 = sphi 0, %s115
      %s135 = sphi 0, %s137
      %s138 = sphi 0, %s135
      %s139 = sphi 0, %s138
      %s155 = sphi 0, %s139
    $region4: #{tpu_custom_call.1} parent=1 // loop_header_branch
      %18 = sbr.rel (%p16) target = $region8
    $region5: #{tpu_custom_call.1} parent=1 // loop_body
      %s20 = ssub.s32 %s15, 1
      %s21 = ssub.s32 %s15, 2
      %s22 = sadd.s32 %s15, 1
      %s24 = sadd.s32 %s23, 1
      %p27 = scmp.eq.s32.totalorder %s15, 3
      %p28 = scmp.ne.s32.totalorder %s23, %s25
      %p29 = scmp.eq.s32.totalorder %s15, 0
      %p30 = por %p28, %p29
      %p31 = scmp.ne.s32.totalorder %s23, %s25
      %p32 = scmp.eq.s32.totalorder %s20, 3
      %p33 = por %p31, %p32
      %p34 = scmp.ne.s32.totalorder %s25, %s26
      %p35 = scmp.eq.s32.totalorder %s20, 0
      %p36 = por %p34, %p35
      %p37 = scmp.ne.s32.totalorder %s25, %s26
      %p38 = scmp.eq.s32.totalorder %s21, 3
      %p39 = por %p37, %p38
      %p41 = scmp.ne.s32.totalorder %s26, %s40
      %p42 = scmp.eq.s32.totalorder %s21, 0
      %p43 = por %p41, %p42
      %s44 = ssub.s32 %s15, %s22
      %p45 = scmp.eq.s32.totalorder %s44, 0
      %s47 = sadd.s32 %s46, 1
      %s48 = scalar_select %p45, %s46, %s47
      %p51 = pneg %p45
      %p52 = scmp.eq.s32.totalorder %s15, 3
      %p53 = por %p51, %p52
      %p54 = scmp.ne.s32.totalorder %s46, %s49
      %p55 = scmp.eq.s32.totalorder %s15, 0
      %p56 = por %p54, %p55
      %p57 = scmp.ne.s32.totalorder %s46, %s49
      %p58 = scmp.eq.s32.totalorder %s20, 3
      %p59 = por %p57, %p58
      %p60 = scmp.ne.s32.totalorder %s49, %s50
      %p61 = scmp.eq.s32.totalorder %s20, 0
      %p62 = por %p60, %p61
      %p63 = scmp.ne.s32.totalorder %s49, %s50
      %p64 = scmp.eq.s32.totalorder %s21, 3
      %p65 = por %p63, %p64
      %p67 = scmp.ne.s32.totalorder %s50, %s66
      %p68 = scmp.eq.s32.totalorder %s21, 0
      %p69 = por %p67, %p68
      %s71 = sadd.s32 %s70, 1
      %p74 = scmp.eq.s32.totalorder %s15, 3
      %p75 = scmp.ne.s32.totalorder %s70, %s72
      %p76 = scmp.eq.s32.totalorder %s15, 0
      %p77 = por %p75, %p76
      %p78 = scmp.ne.s32.totalorder %s70, %s72
      %p79 = scmp.eq.s32.totalorder %s20, 3
      %p80 = por %p78, %p79
      %p81 = scmp.ne.s32.totalorder %s72, %s73
      %p82 = scmp.eq.s32.totalorder %s20, 0
      %p83 = por %p81, %p82
      %p84 = scmp.ne.s32.totalorder %s72, %s73
      %p85 = scmp.eq.s32.totalorder %s21, 3
      %p86 = por %p84, %p85
      %p88 = scmp.ne.s32.totalorder %s73, %s87
      %p89 = scmp.eq.s32.totalorder %s21, 0
      %p90 = por %p88, %p89
      %s92 = sadd.s32 %s91, 1
      %p95 = scmp.eq.s32.totalorder %s15, 3
      %p96 = scmp.ne.s32.totalorder %s91, %s93
      %p97 = scmp.eq.s32.totalorder %s15, 0
      %p98 = por %p96, %p97
      %p99 = scmp.ne.s32.totalorder %s91, %s93
      %p100 = scmp.eq.s32.totalorder %s20, 3
      %p101 = por %p99, %p100
      %p102 = scmp.ne.s32.totalorder %s93, %s94
      %p103 = scmp.eq.s32.totalorder %s20, 0
      %p104 = por %p102, %p103
      %p105 = scmp.ne.s32.totalorder %s93, %s94
      %p106 = scmp.eq.s32.totalorder %s21, 3
      %p107 = por %p105, %p106
      %p109 = scmp.ne.s32.totalorder %s94, %s108
      %p110 = scmp.eq.s32.totalorder %s21, 0
      %p111 = por %p109, %p110
      %s113 = sadd.s32 %s112, 1
      %p116 = scmp.eq.s32.totalorder %s15, 3
      %p117 = scmp.ne.s32.totalorder %s112, %s114
      %p118 = scmp.eq.s32.totalorder %s15, 0
      %p119 = por %p117, %p118
      %p120 = scmp.ne.s32.totalorder %s112, %s114
      %p121 = scmp.eq.s32.totalorder %s20, 3
      %p122 = por %p120, %p121
      %p123 = scmp.ne.s32.totalorder %s114, %s115
      %p124 = scmp.eq.s32.totalorder %s20, 0
      %p125 = por %p123, %p124
      %p126 = scmp.ne.s32.totalorder %s114, %s115
      %p127 = scmp.eq.s32.totalorder %s21, 3
      %p128 = por %p126, %p127
      %p130 = scmp.ne.s32.totalorder %s115, %s129
      %p131 = scmp.eq.s32.totalorder %s21, 0
      %p132 = por %p130, %p131
      %s133 = ssub.s32 %s15, %s22
      %p134 = scmp.eq.s32.totalorder %s133, 0
      %s136 = sadd.s32 %s135, 1
      %s137 = scalar_select %p134, %s135, %s136
      %p140 = pneg %p134
      %p141 = scmp.eq.s32.totalorder %s15, 3
      %p142 = por %p140, %p141
      %p143 = scmp.ne.s32.totalorder %s135, %s138
      %p144 = scmp.eq.s32.totalorder %s15, 0
      %p145 = por %p143, %p144
      %p146 = scmp.ne.s32.totalorder %s135, %s138
      %p147 = scmp.eq.s32.totalorder %s20, 3
      %p148 = por %p146, %p147
      %p149 = scmp.ne.s32.totalorder %s138, %s139
      %p150 = scmp.eq.s32.totalorder %s20, 0
      %p151 = por %p149, %p150
      %p152 = scmp.ne.s32.totalorder %s138, %s139
      %p153 = scmp.eq.s32.totalorder %s21, 3
      %p154 = por %p152, %p153
      %p156 = scmp.ne.s32.totalorder %s139, %s155
      %p157 = scmp.eq.s32.totalorder %s21, 0
      %p158 = por %p156, %p157
      %p159 = scmp.le.s32.totalorder 1, %s15
      %p160 = scmp.lt.s32.totalorder %s15, 5
      %p161 = pnand %p159, %p160
      %p162 = pneg %p161
      // Predicated region
      $region9: #{tpu_custom_call.1} parent=5 // pred_check
        _
      $region10: #{tpu_custom_call.1} parent=5 // pred_check_branch
        %164 = sbr.rel (%p161) target = $region12
      $region11: #{tpu_custom_call.1} parent=5 // pred_region
        %s165 = ssub.s32 %s15, 1
        // Predicated region
        $region13: #{tpu_custom_call.1} parent=11 // pred_check
          %p166 = pneg %p36
        $region14: #{tpu_custom_call.1} parent=11 // pred_check_branch
          %168 = sbr.rel (%p166) target = $region16
        $region15: #{tpu_custom_call.1} parent=11 // pred_region
          _
        $region16: #{tpu_custom_call.1} parent=11 // pred_fallthru
          _
        // Predicated region
        $region17: #{tpu_custom_call.1} parent=11 // pred_check
          %p169 = pneg %p83
        $region18: #{tpu_custom_call.1} parent=11 // pred_check_branch
          %171 = sbr.rel (%p169) target = $region20
        $region19: #{tpu_custom_call.1} parent=11 // pred_region
          _
        $region20: #{tpu_custom_call.1} parent=11 // pred_fallthru
          _
        // Predicated region
        $region21: #{tpu_custom_call.1} parent=11 // pred_check
          %p172 = pneg %p104
        $region22: #{tpu_custom_call.1} parent=11 // pred_check_branch
          %174 = sbr.rel (%p172) target = $region24
        $region23: #{tpu_custom_call.1} parent=11 // pred_region
          _
        $region24: #{tpu_custom_call.1} parent=11 // pred_fallthru
          _
        // Predicated region
        $region25: #{tpu_custom_call.1} parent=11 // pred_check
          %p175 = pneg %p125
        $region26: #{tpu_custom_call.1} parent=11 // pred_check_branch
          %177 = sbr.rel (%p175) target = $region28
        $region27: #{tpu_custom_call.1} parent=11 // pred_region
          _
        $region28: #{tpu_custom_call.1} parent=11 // pred_fallthru
          _
      $region12: #{tpu_custom_call.1} parent=5 // pred_fallthru
        _
      %p178 = scmp.lt.s32.totalorder %s15, 4
      // Predicated region
      $region29: #{tpu_custom_call.1} parent=5 // pred_check
        %p179 = pneg %p178
      $region30: #{tpu_custom_call.1} parent=5 // pred_check_branch
        %181 = sbr.rel (%p179) target = $region32
      $region31: #{tpu_custom_call.1} parent=5 // pred_region
        // Predicated region
        $region33: #{tpu_custom_call.1} parent=31 // pred_check
          %p182 = pneg %p56
        $region34: #{tpu_custom_call.1} parent=31 // pred_check_branch
          %184 = sbr.rel (%p182) target = $region36
        $region35: #{tpu_custom_call.1} parent=31 // pred_region
          %s185 = smul.u32 16, %s15
          %p186 = scmp.lt.s32.totalorder %s185, 63
          %s187 = scalar_select %p186, %s185, 63
          %s188 = smul.addr %s187, 8
          %s189 = scalar_lea.vmem %s1, %s188
          %s190 = smul.u32 16, %s15
        $region36: #{tpu_custom_call.1} parent=31 // pred_fallthru
          _
      $region32: #{tpu_custom_call.1} parent=5 // pred_fallthru
        _
      %p191 = scmp.le.s32.totalorder 1, %s15
      %p192 = scmp.lt.s32.totalorder %s15, 5
      %p193 = pnand %p191, %p192
      %p194 = pneg %p193
      // Predicated region
      $region37: #{tpu_custom_call.1} parent=5 // pred_check
        _
      $region38: #{tpu_custom_call.1} parent=5 // pred_check_branch
        %196 = sbr.rel (%p193) target = $region40
      $region39: #{tpu_custom_call.1} parent=5 // pred_region
        %s197 = ssub.s32 %s15, 1
        %p198 = pneg %p36
        %p199 = pneg %p33
        %s200 = smul.u32 16, %s20
        %p201 = scmp.lt.s32.totalorder %s200, 63
        %s202 = scalar_select %p201, %s200, 63
        %s203 = smul.addr %s202, 8
        %s204 = scalar_lea.vmem %s1, %s203
        %p205 = pneg %p62
        %p206 = pneg %p59
        %p207 = pneg %p83
        %p208 = pneg %p80
        %p209 = pneg %p104
        %p210 = pneg %p101
        %p211 = pneg %p125
        %p212 = pneg %p122
        %p213 = pneg %p151
        %p214 = pneg %p148
        %s215 = sand.u32 %s138, 1
        %s216 = scalar_lea.sflag [#allocation4], %s215
        %s217 = sand.u32 %s138, 1
        %s218 = smul.addr %s217, 128
        %s219 = scalar_lea.vmem [#allocation3], %s218
        %s220 = smul.u32 16, %s20
        %p221 = scmp.lt.s32.totalorder %s220, 63
        %s222 = scalar_select %p221, %s220, 63
        %s223 = smul.addr %s222, 8
        %s224 = scalar_lea.vmem %s1, %s223
        %s225 = smul.u32 16, %s20
        %s226 = smul.u32 16, %s20
        %v227 = vld [vmem:[%s224] sm:$0xff]
        %v228 = vld [vmem:[%s224 + $0x8] sm:$0xff]
        %v229 = vld [vmem:[%s224 + $0x10] sm:$0xff]
        %v230 = vld [vmem:[%s224 + $0x18] sm:$0xff]
        %v231 = vld [vmem:[%s224 + $0x20] sm:$0xff]
        %v232 = vld [vmem:[%s224 + $0x28] sm:$0xff]
        %v233 = vld [vmem:[%s224 + $0x30] sm:$0xff]
        %v234 = vld [vmem:[%s224 + $0x38] sm:$0xff]
        %v235 = vld [vmem:[%s224 + $0x40] sm:$0xff]
        %v236 = vld [vmem:[%s224 + $0x48] sm:$0xff]
        %v237 = vld [vmem:[%s224 + $0x50] sm:$0xff]
        %v238 = vld [vmem:[%s224 + $0x58] sm:$0xff]
        %v239 = vld [vmem:[%s224 + $0x60] sm:$0xff]
        %v240 = vld [vmem:[%s224 + $0x68] sm:$0xff]
        %v241 = vld [vmem:[%s224 + $0x70] sm:$0xff]
        %v242 = vld [vmem:[%s224 + $0x78] sm:$0xff]
        %s243 = sld [smem:[#allocation2]]
        %v244 = vstv %s243
        %v245 = vmul.f32 %v227, %v244
        %v246 = vmul.f32 %v228, %v244
        %v247 = vmul.f32 %v229, %v244
        %v248 = vmul.f32 %v230, %v244
        %v249 = vmul.f32 %v231, %v244
        %v250 = vmul.f32 %v232, %v244
        %v251 = vmul.f32 %v233, %v244
        %v252 = vmul.f32 %v234, %v244
        %v253 = vmul.f32 %v235, %v244
        %v254 = vmul.f32 %v236, %v244
        %v255 = vmul.f32 %v237, %v244
        %v256 = vmul.f32 %v238, %v244
        %v257 = vmul.f32 %v239, %v244
        %v258 = vmul.f32 %v240, %v244
        %v259 = vmul.f32 %v241, %v244
        %v260 = vmul.f32 %v242, %v244
        %v261 = vld [vmem:[%s2] sm:$0xff]
        %v262 = vld [vmem:[%s2 + $0x8] sm:$0xff]
        %v263 = vld [vmem:[%s2 + $0x10] sm:$0xff]
        %v264 = vld [vmem:[%s2 + $0x18] sm:$0xff]
        %v265 = vld [vmem:[%s4] sm:$0x1]
        %v266 = vlaneseq
        %v267 = vshrl.u32 %v266, 7
        %v268 = vsub.s32 0, %v267
        %v269 = vrot.slane %v265, %v268
        %vm270 = vcmask 261120
        %v272 = vsel %vm270, %v245, 0
        %v275 = vsel %vm270, %v246, 0
        %v278 = vsel %vm270, %v247, 0
        %v281 = vsel %vm270, %v248, 0
        %v284 = vsel %vm270, %v249, 0
        %v287 = vsel %vm270, %v250, 0
        %v290 = vsel %vm270, %v251, 0
        %v293 = vsel %vm270, %v252, 0
        %v296 = vsel %vm270, %v253, 0
        %v299 = vsel %vm270, %v254, 0
        %v302 = vsel %vm270, %v255, 0
        %v305 = vsel %vm270, %v256, 0
        %v308 = vsel %vm270, %v257, 0
        %v311 = vsel %vm270, %v258, 0
        %v314 = vsel %vm270, %v259, 0
        %v317 = vsel %vm270, %v260, 0
        %319 = vmatprep.subr.mxu0 0.0
        %320 = vmatpush1.msra.mxu0 0.0
        %321 = vmatprep.subr.mxu0 0.0
        %322 = vmatpush1.msra.mxu0 0.0
        %323 = vmatprep.subr.mxu0 0.0
        %324 = vmatpush1.msra.mxu0 0.0
        %325 = vmatprep.subr.mxu0 0.0
        %326 = vmatpush1.msra.mxu0 0.0
        %327 = vmatprep.subr.mxu0 0.0
        %328 = vmatpush1.msra.mxu0 0.0
        %329 = vmatprep.subr.mxu0 0.0
        %330 = vmatpush1.msra.mxu0 0.0
        %331 = vmatprep.subr.mxu0 0.0
        %332 = vmatpush1.msra.mxu0 0.0
        %333 = vmatprep.subr.mxu0 0.0
        %334 = vmatpush1.msra.mxu0 0.0
        %335 = vmatprep.subr.mxu0 0.0
        %336 = vmatpush1.msra.mxu0 0.0
        %337 = vmatprep.subr.mxu0 0.0
        %338 = vmatpush1.msra.mxu0 0.0
        %339 = vmatprep.subr.mxu0 0.0
        %340 = vmatpush1.msra.mxu0 0.0
        %341 = vmatprep.subr.mxu0 0.0
        %342 = vmatpush1.msra.mxu0 0.0
        %343 = vmatprep.subr.mxu0 0.0
        %344 = vmatpush1.msra.mxu0 %v264
        %345 = vmatprep.subr.mxu0 0.0
        %346 = vmatpush1.msra.mxu0 %v263
        %347 = vmatprep.subr.mxu0 0.0
        %348 = vmatpush1.msra.mxu0 %v262
        %349 = vmatprep.subr.mxu0 0.0
        %350 = vmatpush1.msra.mxu0 %v261
        %351 = vmatprep.subr.mxu0 0.0
        %352 = vmatpush2.msra.mxu0 0.0
        %353 = vmatprep.subr.mxu0 0.0
        %354 = vmatpush2.msra.mxu0 0.0
        %355 = vmatprep.subr.mxu0 0.0
        %356 = vmatpush2.msra.mxu0 0.0
        %357 = vmatprep.subr.mxu0 0.0
        %358 = vmatpush2.msra.mxu0 0.0
        %359 = vmatprep.subr.mxu0 0.0
        %360 = vmatpush2.msra.mxu0 0.0
        %361 = vmatprep.subr.mxu0 0.0
        %362 = vmatpush2.msra.mxu0 0.0
        %363 = vmatprep.subr.mxu0 0.0
        %364 = vmatpush2.msra.mxu0 0.0
        %365 = vmatprep.subr.mxu0 0.0
        %366 = vmatpush2.msra.mxu0 0.0
        %367 = vmatprep.subr.mxu0 0.0
        %368 = vmatpush2.msra.mxu0 0.0
        %369 = vmatprep.subr.mxu0 0.0
        %370 = vmatpush2.msra.mxu0 0.0
        %371 = vmatprep.subr.mxu0 0.0
        %372 = vmatpush2.msra.mxu0 0.0
        %373 = vmatprep.subr.mxu0 0.0
        %374 = vmatpush2.msra.mxu0 0.0
        %375 = vmatprep.subr.mxu0 0.0
        %376 = vmatpush2.msra.mxu0 0.0
        %377 = vmatprep.subr.mxu0 0.0
        %378 = vmatpush2.msra.mxu0 0.0
        %379 = vmatprep.subr.mxu0 0.0
        %380 = vmatpush2.msra.mxu0 0.0
        %381 = vmatprep.subr.mxu0 0.0
        %382 = vmatpush2.msra.mxu0 0.0
        %383 = vmatprep.mubr.f32.mxu0 0.0
        %384 = vmatmul.mubr.f32.gmra.mxu0 %v272
        %v385 = vpop.f32.mrf.mxu0
        %v386 = vadd.f32 %v269, %v385
        %v387 = vpop.f32.mrf.mxu0
        %388 = vmatprep.mubr.f32.mxu0 0.0
        %389 = vmatmul.mubr.f32.gmra.mxu0 %v275
        %v390 = vpop.f32.mrf.mxu0
        %v391 = vadd.f32 %v269, %v390
        %v392 = vpop.f32.mrf.mxu0
        %393 = vmatprep.mubr.f32.mxu0 0.0
        %394 = vmatmul.mubr.f32.gmra.mxu0 %v278
        %v395 = vpop.f32.mrf.mxu0
        %v396 = vadd.f32 %v269, %v395
        %v397 = vpop.f32.mrf.mxu0
        %398 = vmatprep.mubr.f32.mxu0 0.0
        %399 = vmatmul.mubr.f32.gmra.mxu0 %v281
        %v400 = vpop.f32.mrf.mxu0
        %v401 = vadd.f32 %v269, %v400
        %v402 = vpop.f32.mrf.mxu0
        %403 = vmatprep.mubr.f32.mxu0 0.0
        %404 = vmatmul.mubr.f32.gmra.mxu0 %v284
        %v405 = vpop.f32.mrf.mxu0
        %v406 = vadd.f32 %v269, %v405
        %v407 = vpop.f32.mrf.mxu0
        %408 = vmatprep.mubr.f32.mxu0 0.0
        %409 = vmatmul.mubr.f32.gmra.mxu0 %v287
        %v410 = vpop.f32.mrf.mxu0
        %v411 = vadd.f32 %v269, %v410
        %v412 = vpop.f32.mrf.mxu0
        %413 = vmatprep.mubr.f32.mxu0 0.0
        %414 = vmatmul.mubr.f32.gmra.mxu0 %v290
        %v415 = vpop.f32.mrf.mxu0
        %v416 = vadd.f32 %v269, %v415
        %v417 = vpop.f32.mrf.mxu0
        %418 = vmatprep.mubr.f32.mxu0 0.0
        %419 = vmatmul.mubr.f32.gmra.mxu0 %v293
        %v420 = vpop.f32.mrf.mxu0
        %v421 = vadd.f32 %v269, %v420
        %v422 = vpop.f32.mrf.mxu0
        %423 = vmatprep.mubr.f32.mxu0 0.0
        %424 = vmatmul.mubr.f32.gmra.mxu0 %v296
        %v425 = vpop.f32.mrf.mxu0
        %v426 = vadd.f32 %v269, %v425
        %v427 = vpop.f32.mrf.mxu0
        %428 = vmatprep.mubr.f32.mxu0 0.0
        %429 = vmatmul.mubr.f32.gmra.mxu0 %v299
        %v430 = vpop.f32.mrf.mxu0
        %v431 = vadd.f32 %v269, %v430
        %v432 = vpop.f32.mrf.mxu0
        %433 = vmatprep.mubr.f32.mxu0 0.0
        %434 = vmatmul.mubr.f32.gmra.mxu0 %v302
        %v435 = vpop.f32.mrf.mxu0
        %v436 = vadd.f32 %v269, %v435
        %v437 = vpop.f32.mrf.mxu0
        %438 = vmatprep.mubr.f32.mxu0 0.0
        %439 = vmatmul.mubr.f32.gmra.mxu0 %v305
        %v440 = vpop.f32.mrf.mxu0
        %v441 = vadd.f32 %v269, %v440
        %v442 = vpop.f32.mrf.mxu0
        %443 = vmatprep.mubr.f32.mxu0 0.0
        %444 = vmatmul.mubr.f32.gmra.mxu0 %v308
        %v445 = vpop.f32.mrf.mxu0
        %v446 = vadd.f32 %v269, %v445
        %v447 = vpop.f32.mrf.mxu0
        %448 = vmatprep.mubr.f32.mxu0 0.0
        %449 = vmatmul.mubr.f32.gmra.mxu0 %v311
        %v450 = vpop.f32.mrf.mxu0
        %v451 = vadd.f32 %v269, %v450
        %v452 = vpop.f32.mrf.mxu0
        %453 = vmatprep.mubr.f32.mxu0 0.0
        %454 = vmatmul.mubr.f32.gmra.mxu0 %v314
        %v455 = vpop.f32.mrf.mxu0
        %v456 = vadd.f32 %v269, %v455
        %v457 = vpop.f32.mrf.mxu0
        %458 = vmatprep.mubr.f32.mxu0 0.0
        %459 = vmatmul.mubr.f32.gmra.mxu0 %v317
        %v460 = vpop.f32.mrf.mxu0
        %v461 = vadd.f32 %v269, %v460
        %v462 = vpop.f32.mrf.mxu0
        %463 = vdwg.mxu0
        %vm464 = vcmp.gt.f32.partialorder %v386, 0.0
        %vm465 = vcmp.gt.f32.partialorder %v391, 0.0
        %vm466 = vcmp.gt.f32.partialorder %v396, 0.0
        %vm467 = vcmp.gt.f32.partialorder %v401, 0.0
        %vm468 = vcmp.gt.f32.partialorder %v406, 0.0
        %vm469 = vcmp.gt.f32.partialorder %v411, 0.0
        %vm470 = vcmp.gt.f32.partialorder %v416, 0.0
        %vm471 = vcmp.gt.f32.partialorder %v421, 0.0
        %vm472 = vcmp.gt.f32.partialorder %v426, 0.0
        %vm473 = vcmp.gt.f32.partialorder %v431, 0.0
        %vm474 = vcmp.gt.f32.partialorder %v436, 0.0
        %vm475 = vcmp.gt.f32.partialorder %v441, 0.0
        %vm476 = vcmp.gt.f32.partialorder %v446, 0.0
        %vm477 = vcmp.gt.f32.partialorder %v451, 0.0
        %vm478 = vcmp.gt.f32.partialorder %v456, 0.0
        %vm479 = vcmp.gt.f32.partialorder %v461, 0.0
        %v480 = vmul.f32 %v386, 0.01
        %v481 = vmul.f32 %v391, 0.01
        %v482 = vmul.f32 %v396, 0.01
        %v483 = vmul.f32 %v401, 0.01
        %v484 = vmul.f32 %v406, 0.01
        %v485 = vmul.f32 %v411, 0.01
        %v486 = vmul.f32 %v416, 0.01
        %v487 = vmul.f32 %v421, 0.01
        %v488 = vmul.f32 %v426, 0.01
        %v489 = vmul.f32 %v431, 0.01
        %v490 = vmul.f32 %v436, 0.01
        %v491 = vmul.f32 %v441, 0.01
        %v492 = vmul.f32 %v446, 0.01
        %v493 = vmul.f32 %v451, 0.01
        %v494 = vmul.f32 %v456, 0.01
        %v495 = vmul.f32 %v461, 0.01
        %v496 = vsel %vm464, %v386, %v480
        %v497 = vsel %vm465, %v391, %v481
        %v498 = vsel %vm466, %v396, %v482
        %v499 = vsel %vm467, %v401, %v483
        %v500 = vsel %vm468, %v406, %v484
        %v501 = vsel %vm469, %v411, %v485
        %v502 = vsel %vm470, %v416, %v486
        %v503 = vsel %vm471, %v421, %v487
        %v504 = vsel %vm472, %v426, %v488
        %v505 = vsel %vm473, %v431, %v489
        %v506 = vsel %vm474, %v436, %v490
        %v507 = vsel %vm475, %v441, %v491
        %v508 = vsel %vm476, %v446, %v492
        %v509 = vsel %vm477, %v451, %v493
        %v510 = vsel %vm478, %v456, %v494
        %v511 = vsel %vm479, %v461, %v495
        %v512 = vld [vmem:[%s3] sm:$0xff]
        %v513 = vld [vmem:[%s3 + $0x8] sm:$0xff]
        %v514 = vld [vmem:[%s3 + $0x10] sm:$0xff]
        %v515 = vld [vmem:[%s3 + $0x18] sm:$0xff]
        %v516 = vld [vmem:[%s3 + $0x20] sm:$0xff]
        %v517 = vld [vmem:[%s3 + $0x28] sm:$0xff]
        %v518 = vld [vmem:[%s3 + $0x30] sm:$0xff]
        %v519 = vld [vmem:[%s3 + $0x38] sm:$0xff]
        %v520 = vld [vmem:[%s3 + $0x40] sm:$0xff]
        %v521 = vld [vmem:[%s3 + $0x48] sm:$0xff]
        %v522 = vld [vmem:[%s3 + $0x50] sm:$0xff]
        %v523 = vld [vmem:[%s3 + $0x58] sm:$0xff]
        %v524 = vld [vmem:[%s3 + $0x60] sm:$0xff]
        %v525 = vld [vmem:[%s3 + $0x68] sm:$0xff]
        %v526 = vld [vmem:[%s3 + $0x70] sm:$0xff]
        %v527 = vld [vmem:[%s3 + $0x78] sm:$0xff]
        %v528 = vld [vmem:[%s4 + $0x1] sm:$0x1]
        %v529 = vlaneseq
        %v530 = vshrl.u32 %v529, 7
        %v531 = vsub.s32 0, %v530
        %v532 = vrot.slane %v528, %v531
        %533 = vmatprep.subr.mxu0 0.0
        %534 = vmatpush1.msra.mxu0 %v527
        %535 = vmatprep.subr.mxu0 0.0
        %536 = vmatpush1.msra.mxu0 %v526
        %537 = vmatprep.subr.mxu0 0.0
        %538 = vmatpush1.msra.mxu0 %v525
        %539 = vmatprep.subr.mxu0 0.0
        %540 = vmatpush1.msra.mxu0 %v524
        %541 = vmatprep.subr.mxu0 0.0
        %542 = vmatpush1.msra.mxu0 %v523
        %543 = vmatprep.subr.mxu0 0.0
        %544 = vmatpush1.msra.mxu0 %v522
        %545 = vmatprep.subr.mxu0 0.0
        %546 = vmatpush1.msra.mxu0 %v521
        %547 = vmatprep.subr.mxu0 0.0
        %548 = vmatpush1.msra.mxu0 %v520
        %549 = vmatprep.subr.mxu0 0.0
        %550 = vmatpush1.msra.mxu0 %v519
        %551 = vmatprep.subr.mxu0 0.0
        %552 = vmatpush1.msra.mxu0 %v518
        %553 = vmatprep.subr.mxu0 0.0
        %554 = vmatpush1.msra.mxu0 %v517
        %555 = vmatprep.subr.mxu0 0.0
        %556 = vmatpush1.msra.mxu0 %v516
        %557 = vmatprep.subr.mxu0 0.0
        %558 = vmatpush1.msra.mxu0 %v515
        %559 = vmatprep.subr.mxu0 0.0
        %560 = vmatpush1.msra.mxu0 %v514
        %561 = vmatprep.subr.mxu0 0.0
        %562 = vmatpush1.msra.mxu0 %v513
        %563 = vmatprep.subr.mxu0 0.0
        %564 = vmatpush1.msra.mxu0 %v512
        %565 = vmatprep.subr.mxu0 0.0
        %566 = vmatpush2.msra.mxu0 0.0
        %567 = vmatprep.subr.mxu0 0.0
        %568 = vmatpush2.msra.mxu0 0.0
        %569 = vmatprep.subr.mxu0 0.0
        %570 = vmatpush2.msra.mxu0 0.0
        %571 = vmatprep.subr.mxu0 0.0
        %572 = vmatpush2.msra.mxu0 0.0
        %573 = vmatprep.subr.mxu0 0.0
        %574 = vmatpush2.msra.mxu0 0.0
        %575 = vmatprep.subr.mxu0 0.0
        %576 = vmatpush2.msra.mxu0 0.0
        %577 = vmatprep.subr.mxu0 0.0
        %578 = vmatpush2.msra.mxu0 0.0
        %579 = vmatprep.subr.mxu0 0.0
        %580 = vmatpush2.msra.mxu0 0.0
        %581 = vmatprep.subr.mxu0 0.0
        %582 = vmatpush2.msra.mxu0 0.0
        %583 = vmatprep.subr.mxu0 0.0
        %584 = vmatpush2.msra.mxu0 0.0
        %585 = vmatprep.subr.mxu0 0.0
        %586 = vmatpush2.msra.mxu0 0.0
        %587 = vmatprep.subr.mxu0 0.0
        %588 = vmatpush2.msra.mxu0 0.0
        %589 = vmatprep.subr.mxu0 0.0
        %590 = vmatpush2.msra.mxu0 0.0
        %591 = vmatprep.subr.mxu0 0.0
        %592 = vmatpush2.msra.mxu0 0.0
        %593 = vmatprep.subr.mxu0 0.0
        %594 = vmatpush2.msra.mxu0 0.0
        %595 = vmatprep.subr.mxu0 0.0
        %596 = vmatpush2.msra.mxu0 0.0
        %597 = vmatprep.mubr.f32.mxu0 0.0
        %598 = vmatmul.mubr.f32.gmra.mxu0 %v496
        %v599 = vpop.f32.mrf.mxu0
        %v600 = vadd.f32 %v532, %v599
        %v601 = vpop.f32.mrf.mxu0
        %602 = vmatprep.mubr.f32.mxu0 0.0
        %603 = vmatmul.mubr.f32.gmra.mxu0 %v497
        %v604 = vpop.f32.mrf.mxu0
        %v605 = vadd.f32 %v532, %v604
        %v606 = vpop.f32.mrf.mxu0
        %607 = vmatprep.mubr.f32.mxu0 0.0
        %608 = vmatmul.mubr.f32.gmra.mxu0 %v498
        %v609 = vpop.f32.mrf.mxu0
        %v610 = vadd.f32 %v532, %v609
        %v611 = vpop.f32.mrf.mxu0
        %612 = vmatprep.mubr.f32.mxu0 0.0
        %613 = vmatmul.mubr.f32.gmra.mxu0 %v499
        %v614 = vpop.f32.mrf.mxu0
        %v615 = vadd.f32 %v532, %v614
        %v616 = vpop.f32.mrf.mxu0
        %617 = vmatprep.mubr.f32.mxu0 0.0
        %618 = vmatmul.mubr.f32.gmra.mxu0 %v500
        %v619 = vpop.f32.mrf.mxu0
        %v620 = vadd.f32 %v532, %v619
        %v621 = vpop.f32.mrf.mxu0
        %622 = vmatprep.mubr.f32.mxu0 0.0
        %623 = vmatmul.mubr.f32.gmra.mxu0 %v501
        %v624 = vpop.f32.mrf.mxu0
        %v625 = vadd.f32 %v532, %v624
        %v626 = vpop.f32.mrf.mxu0
        %627 = vmatprep.mubr.f32.mxu0 0.0
        %628 = vmatmul.mubr.f32.gmra.mxu0 %v502
        %v629 = vpop.f32.mrf.mxu0
        %v630 = vadd.f32 %v532, %v629
        %v631 = vpop.f32.mrf.mxu0
        %632 = vmatprep.mubr.f32.mxu0 0.0
        %633 = vmatmul.mubr.f32.gmra.mxu0 %v503
        %v634 = vpop.f32.mrf.mxu0
        %v635 = vadd.f32 %v532, %v634
        %v636 = vpop.f32.mrf.mxu0
        %637 = vmatprep.mubr.f32.mxu0 0.0
        %638 = vmatmul.mubr.f32.gmra.mxu0 %v504
        %v639 = vpop.f32.mrf.mxu0
        %v640 = vadd.f32 %v532, %v639
        %v641 = vpop.f32.mrf.mxu0
        %642 = vmatprep.mubr.f32.mxu0 0.0
        %643 = vmatmul.mubr.f32.gmra.mxu0 %v505
        %v644 = vpop.f32.mrf.mxu0
        %v645 = vadd.f32 %v532, %v644
        %v646 = vpop.f32.mrf.mxu0
        %647 = vmatprep.mubr.f32.mxu0 0.0
        %648 = vmatmul.mubr.f32.gmra.mxu0 %v506
        %v649 = vpop.f32.mrf.mxu0
        %v650 = vadd.f32 %v532, %v649
        %v651 = vpop.f32.mrf.mxu0
        %652 = vmatprep.mubr.f32.mxu0 0.0
        %653 = vmatmul.mubr.f32.gmra.mxu0 %v507
        %v654 = vpop.f32.mrf.mxu0
        %v655 = vadd.f32 %v532, %v654
        %v656 = vpop.f32.mrf.mxu0
        %657 = vmatprep.mubr.f32.mxu0 0.0
        %658 = vmatmul.mubr.f32.gmra.mxu0 %v508
        %v659 = vpop.f32.mrf.mxu0
        %v660 = vadd.f32 %v532, %v659
        %v661 = vpop.f32.mrf.mxu0
        %662 = vmatprep.mubr.f32.mxu0 0.0
        %663 = vmatmul.mubr.f32.gmra.mxu0 %v509
        %v664 = vpop.f32.mrf.mxu0
        %v665 = vadd.f32 %v532, %v664
        %v666 = vpop.f32.mrf.mxu0
        %667 = vmatprep.mubr.f32.mxu0 0.0
        %668 = vmatmul.mubr.f32.gmra.mxu0 %v510
        %v669 = vpop.f32.mrf.mxu0
        %v670 = vadd.f32 %v532, %v669
        %v671 = vpop.f32.mrf.mxu0
        %672 = vmatprep.mubr.f32.mxu0 0.0
        %673 = vmatmul.mubr.f32.gmra.mxu0 %v511
        %v674 = vpop.f32.mrf.mxu0
        %v675 = vadd.f32 %v532, %v674
        %v676 = vpop.f32.mrf.mxu0
        %677 = vdwg.mxu0
        %vm678 = vcmp.gt.f32.partialorder %v600, 0.0
        %vm679 = vcmp.gt.f32.partialorder %v605, 0.0
        %vm680 = vcmp.gt.f32.partialorder %v610, 0.0
        %vm681 = vcmp.gt.f32.partialorder %v615, 0.0
        %vm682 = vcmp.gt.f32.partialorder %v620, 0.0
        %vm683 = vcmp.gt.f32.partialorder %v625, 0.0
        %vm684 = vcmp.gt.f32.partialorder %v630, 0.0
        %vm685 = vcmp.gt.f32.partialorder %v635, 0.0
        %vm686 = vcmp.gt.f32.partialorder %v640, 0.0
        %vm687 = vcmp.gt.f32.partialorder %v645, 0.0
        %vm688 = vcmp.gt.f32.partialorder %v650, 0.0
        %vm689 = vcmp.gt.f32.partialorder %v655, 0.0
        %vm690 = vcmp.gt.f32.partialorder %v660, 0.0
        %vm691 = vcmp.gt.f32.partialorder %v665, 0.0
        %vm692 = vcmp.gt.f32.partialorder %v670, 0.0
        %vm693 = vcmp.gt.f32.partialorder %v675, 0.0
        %v694 = vmul.f32 %v600, 0.01
        %v695 = vmul.f32 %v605, 0.01
        %v696 = vmul.f32 %v610, 0.01
        %v697 = vmul.f32 %v615, 0.01
        %v698 = vmul.f32 %v620, 0.01
        %v699 = vmul.f32 %v625, 0.01
        %v700 = vmul.f32 %v630, 0.01
        %v701 = vmul.f32 %v635, 0.01
        %v702 = vmul.f32 %v640, 0.01
        %v703 = vmul.f32 %v645, 0.01
        %v704 = vmul.f32 %v650, 0.01
        %v705 = vmul.f32 %v655, 0.01
        %v706 = vmul.f32 %v660, 0.01
        %v707 = vmul.f32 %v665, 0.01
        %v708 = vmul.f32 %v670, 0.01
        %v709 = vmul.f32 %v675, 0.01
        %v710 = vsel %vm678, %v600, %v694
        %v711 = vsel %vm679, %v605, %v695
        %v712 = vsel %vm680, %v610, %v696
        %v713 = vsel %vm681, %v615, %v697
        %v714 = vsel %vm682, %v620, %v698
        %v715 = vsel %vm683, %v625, %v699
        %v716 = vsel %vm684, %v630, %v700
        %v717 = vsel %vm685, %v635, %v701
        %v718 = vsel %vm686, %v640, %v702
        %v719 = vsel %vm687, %v645, %v703
        %v720 = vsel %vm688, %v650, %v704
        %v721 = vsel %vm689, %v655, %v705
        %v722 = vsel %vm690, %v660, %v706
        %v723 = vsel %vm691, %v665, %v707
        %v724 = vsel %vm692, %v670, %v708
        %v725 = vsel %vm693, %v675, %v709
        %s726 = scalar_lea.vmem %s3, 128
        %v727 = vld [vmem:[%s726] sm:$0xff]
        %v728 = vld [vmem:[%s726 + $0x8] sm:$0xff]
        %v729 = vld [vmem:[%s726 + $0x10] sm:$0xff]
        %v730 = vld [vmem:[%s726 + $0x18] sm:$0xff]
        %v731 = vld [vmem:[%s726 + $0x20] sm:$0xff]
        %v732 = vld [vmem:[%s726 + $0x28] sm:$0xff]
        %v733 = vld [vmem:[%s726 + $0x30] sm:$0xff]
        %v734 = vld [vmem:[%s726 + $0x38] sm:$0xff]
        %v735 = vld [vmem:[%s726 + $0x40] sm:$0xff]
        %v736 = vld [vmem:[%s726 + $0x48] sm:$0xff]
        %v737 = vld [vmem:[%s726 + $0x50] sm:$0xff]
        %v738 = vld [vmem:[%s726 + $0x58] sm:$0xff]
        %v739 = vld [vmem:[%s726 + $0x60] sm:$0xff]
        %v740 = vld [vmem:[%s726 + $0x68] sm:$0xff]
        %v741 = vld [vmem:[%s726 + $0x70] sm:$0xff]
        %v742 = vld [vmem:[%s726 + $0x78] sm:$0xff]
        %v743 = vld [vmem:[%s4 + $0x2] sm:$0x1]
        %v744 = vlaneseq
        %v745 = vshrl.u32 %v744, 7
        %v746 = vsub.s32 0, %v745
        %v747 = vrot.slane %v743, %v746
        %748 = vmatprep.subr.mxu0 0.0
        %749 = vmatpush1.msra.mxu0 %v742
        %750 = vmatprep.subr.mxu0 0.0
        %751 = vmatpush1.msra.mxu0 %v741
        %752 = vmatprep.subr.mxu0 0.0
        %753 = vmatpush1.msra.mxu0 %v740
        %754 = vmatprep.subr.mxu0 0.0
        %755 = vmatpush1.msra.mxu0 %v739
        %756 = vmatprep.subr.mxu0 0.0
        %757 = vmatpush1.msra.mxu0 %v738
        %758 = vmatprep.subr.mxu0 0.0
        %759 = vmatpush1.msra.mxu0 %v737
        %760 = vmatprep.subr.mxu0 0.0
        %761 = vmatpush1.msra.mxu0 %v736
        %762 = vmatprep.subr.mxu0 0.0
        %763 = vmatpush1.msra.mxu0 %v735
        %764 = vmatprep.subr.mxu0 0.0
        %765 = vmatpush1.msra.mxu0 %v734
        %766 = vmatprep.subr.mxu0 0.0
        %767 = vmatpush1.msra.mxu0 %v733
        %768 = vmatprep.subr.mxu0 0.0
        %769 = vmatpush1.msra.mxu0 %v732
        %770 = vmatprep.subr.mxu0 0.0
        %771 = vmatpush1.msra.mxu0 %v731
        %772 = vmatprep.subr.mxu0 0.0
        %773 = vmatpush1.msra.mxu0 %v730
        %774 = vmatprep.subr.mxu0 0.0
        %775 = vmatpush1.msra.mxu0 %v729
        %776 = vmatprep.subr.mxu0 0.0
        %777 = vmatpush1.msra.mxu0 %v728
        %778 = vmatprep.subr.mxu0 0.0
        %779 = vmatpush1.msra.mxu0 %v727
        %780 = vmatprep.subr.mxu0 0.0
        %781 = vmatpush2.msra.mxu0 0.0
        %782 = vmatprep.subr.mxu0 0.0
        %783 = vmatpush2.msra.mxu0 0.0
        %784 = vmatprep.subr.mxu0 0.0
        %785 = vmatpush2.msra.mxu0 0.0
        %786 = vmatprep.subr.mxu0 0.0
        %787 = vmatpush2.msra.mxu0 0.0
        %788 = vmatprep.subr.mxu0 0.0
        %789 = vmatpush2.msra.mxu0 0.0
        %790 = vmatprep.subr.mxu0 0.0
        %791 = vmatpush2.msra.mxu0 0.0
        %792 = vmatprep.subr.mxu0 0.0
        %793 = vmatpush2.msra.mxu0 0.0
        %794 = vmatprep.subr.mxu0 0.0
        %795 = vmatpush2.msra.mxu0 0.0
        %796 = vmatprep.subr.mxu0 0.0
        %797 = vmatpush2.msra.mxu0 0.0
        %798 = vmatprep.subr.mxu0 0.0
        %799 = vmatpush2.msra.mxu0 0.0
        %800 = vmatprep.subr.mxu0 0.0
        %801 = vmatpush2.msra.mxu0 0.0
        %802 = vmatprep.subr.mxu0 0.0
        %803 = vmatpush2.msra.mxu0 0.0
        %804 = vmatprep.subr.mxu0 0.0
        %805 = vmatpush2.msra.mxu0 0.0
        %806 = vmatprep.subr.mxu0 0.0
        %807 = vmatpush2.msra.mxu0 0.0
        %808 = vmatprep.subr.mxu0 0.0
        %809 = vmatpush2.msra.mxu0 0.0
        %810 = vmatprep.subr.mxu0 0.0
        %811 = vmatpush2.msra.mxu0 0.0
        %812 = vmatprep.mubr.f32.mxu0 0.0
        %813 = vmatmul.mubr.f32.gmra.mxu0 %v710
        %v814 = vpop.f32.mrf.mxu0
        %v815 = vadd.f32 %v747, %v814
        %v816 = vpop.f32.mrf.mxu0
        %817 = vmatprep.mubr.f32.mxu0 0.0
        %818 = vmatmul.mubr.f32.gmra.mxu0 %v711
        %v819 = vpop.f32.mrf.mxu0
        %v820 = vadd.f32 %v747, %v819
        %v821 = vpop.f32.mrf.mxu0
        %822 = vmatprep.mubr.f32.mxu0 0.0
        %823 = vmatmul.mubr.f32.gmra.mxu0 %v712
        %v824 = vpop.f32.mrf.mxu0
        %v825 = vadd.f32 %v747, %v824
        %v826 = vpop.f32.mrf.mxu0
        %827 = vmatprep.mubr.f32.mxu0 0.0
        %828 = vmatmul.mubr.f32.gmra.mxu0 %v713
        %v829 = vpop.f32.mrf.mxu0
        %v830 = vadd.f32 %v747, %v829
        %v831 = vpop.f32.mrf.mxu0
        %832 = vmatprep.mubr.f32.mxu0 0.0
        %833 = vmatmul.mubr.f32.gmra.mxu0 %v714
        %v834 = vpop.f32.mrf.mxu0
        %v835 = vadd.f32 %v747, %v834
        %v836 = vpop.f32.mrf.mxu0
        %837 = vmatprep.mubr.f32.mxu0 0.0
        %838 = vmatmul.mubr.f32.gmra.mxu0 %v715
        %v839 = vpop.f32.mrf.mxu0
        %v840 = vadd.f32 %v747, %v839
        %v841 = vpop.f32.mrf.mxu0
        %842 = vmatprep.mubr.f32.mxu0 0.0
        %843 = vmatmul.mubr.f32.gmra.mxu0 %v716
        %v844 = vpop.f32.mrf.mxu0
        %v845 = vadd.f32 %v747, %v844
        %v846 = vpop.f32.mrf.mxu0
        %847 = vmatprep.mubr.f32.mxu0 0.0
        %848 = vmatmul.mubr.f32.gmra.mxu0 %v717
        %v849 = vpop.f32.mrf.mxu0
        %v850 = vadd.f32 %v747, %v849
        %v851 = vpop.f32.mrf.mxu0
        %852 = vmatprep.mubr.f32.mxu0 0.0
        %853 = vmatmul.mubr.f32.gmra.mxu0 %v718
        %v854 = vpop.f32.mrf.mxu0
        %v855 = vadd.f32 %v747, %v854
        %v856 = vpop.f32.mrf.mxu0
        %857 = vmatprep.mubr.f32.mxu0 0.0
        %858 = vmatmul.mubr.f32.gmra.mxu0 %v719
        %v859 = vpop.f32.mrf.mxu0
        %v860 = vadd.f32 %v747, %v859
        %v861 = vpop.f32.mrf.mxu0
        %862 = vmatprep.mubr.f32.mxu0 0.0
        %863 = vmatmul.mubr.f32.gmra.mxu0 %v720
        %v864 = vpop.f32.mrf.mxu0
        %v865 = vadd.f32 %v747, %v864
        %v866 = vpop.f32.mrf.mxu0
        %867 = vmatprep.mubr.f32.mxu0 0.0
        %868 = vmatmul.mubr.f32.gmra.mxu0 %v721
        %v869 = vpop.f32.mrf.mxu0
        %v870 = vadd.f32 %v747, %v869
        %v871 = vpop.f32.mrf.mxu0
        %872 = vmatprep.mubr.f32.mxu0 0.0
        %873 = vmatmul.mubr.f32.gmra.mxu0 %v722
        %v874 = vpop.f32.mrf.mxu0
        %v875 = vadd.f32 %v747, %v874
        %v876 = vpop.f32.mrf.mxu0
        %877 = vmatprep.mubr.f32.mxu0 0.0
        %878 = vmatmul.mubr.f32.gmra.mxu0 %v723
        %v879 = vpop.f32.mrf.mxu0
        %v880 = vadd.f32 %v747, %v879
        %v881 = vpop.f32.mrf.mxu0
        %882 = vmatprep.mubr.f32.mxu0 0.0
        %883 = vmatmul.mubr.f32.gmra.mxu0 %v724
        %v884 = vpop.f32.mrf.mxu0
        %v885 = vadd.f32 %v747, %v884
        %v886 = vpop.f32.mrf.mxu0
        %887 = vmatprep.mubr.f32.mxu0 0.0
        %888 = vmatmul.mubr.f32.gmra.mxu0 %v725
        %v889 = vpop.f32.mrf.mxu0
        %v890 = vadd.f32 %v747, %v889
        %v891 = vpop.f32.mrf.mxu0
        %892 = vdwg.mxu0
        %vm893 = vcmp.gt.f32.partialorder %v815, 0.0
        %vm894 = vcmp.gt.f32.partialorder %v820, 0.0
        %vm895 = vcmp.gt.f32.partialorder %v825, 0.0
        %vm896 = vcmp.gt.f32.partialorder %v830, 0.0
        %vm897 = vcmp.gt.f32.partialorder %v835, 0.0
        %vm898 = vcmp.gt.f32.partialorder %v840, 0.0
        %vm899 = vcmp.gt.f32.partialorder %v845, 0.0
        %vm900 = vcmp.gt.f32.partialorder %v850, 0.0
        %vm901 = vcmp.gt.f32.partialorder %v855, 0.0
        %vm902 = vcmp.gt.f32.partialorder %v860, 0.0
        %vm903 = vcmp.gt.f32.partialorder %v865, 0.0
        %vm904 = vcmp.gt.f32.partialorder %v870, 0.0
        %vm905 = vcmp.gt.f32.partialorder %v875, 0.0
        %vm906 = vcmp.gt.f32.partialorder %v880, 0.0
        %vm907 = vcmp.gt.f32.partialorder %v885, 0.0
        %vm908 = vcmp.gt.f32.partialorder %v890, 0.0
        %v909 = vmul.f32 %v815, 0.01
        %v910 = vmul.f32 %v820, 0.01
        %v911 = vmul.f32 %v825, 0.01
        %v912 = vmul.f32 %v830, 0.01
        %v913 = vmul.f32 %v835, 0.01
        %v914 = vmul.f32 %v840, 0.01
        %v915 = vmul.f32 %v845, 0.01
        %v916 = vmul.f32 %v850, 0.01
        %v917 = vmul.f32 %v855, 0.01
        %v918 = vmul.f32 %v860, 0.01
        %v919 = vmul.f32 %v865, 0.01
        %v920 = vmul.f32 %v870, 0.01
        %v921 = vmul.f32 %v875, 0.01
        %v922 = vmul.f32 %v880, 0.01
        %v923 = vmul.f32 %v885, 0.01
        %v924 = vmul.f32 %v890, 0.01
        %v925 = vsel %vm893, %v815, %v909
        %v926 = vsel %vm894, %v820, %v910
        %v927 = vsel %vm895, %v825, %v911
        %v928 = vsel %vm896, %v830, %v912
        %v929 = vsel %vm897, %v835, %v913
        %v930 = vsel %vm898, %v840, %v914
        %v931 = vsel %vm899, %v845, %v915
        %v932 = vsel %vm900, %v850, %v916
        %v933 = vsel %vm901, %v855, %v917
        %v934 = vsel %vm902, %v860, %v918
        %v935 = vsel %vm903, %v865, %v919
        %v936 = vsel %vm904, %v870, %v920
        %v937 = vsel %vm905, %v875, %v921
        %v938 = vsel %vm906, %v880, %v922
        %v939 = vsel %vm907, %v885, %v923
        %v940 = vsel %vm908, %v890, %v924
        %s941 = scalar_lea.vmem %s3, 256
        %v942 = vld [vmem:[%s941] sm:$0xff]
        %v943 = vld [vmem:[%s941 + $0x8] sm:$0xff]
        %v944 = vld [vmem:[%s941 + $0x10] sm:$0xff]
        %v945 = vld [vmem:[%s941 + $0x18] sm:$0xff]
        %v946 = vld [vmem:[%s941 + $0x20] sm:$0xff]
        %v947 = vld [vmem:[%s941 + $0x28] sm:$0xff]
        %v948 = vld [vmem:[%s941 + $0x30] sm:$0xff]
        %v949 = vld [vmem:[%s941 + $0x38] sm:$0xff]
        %v950 = vld [vmem:[%s941 + $0x40] sm:$0xff]
        %v951 = vld [vmem:[%s941 + $0x48] sm:$0xff]
        %v952 = vld [vmem:[%s941 + $0x50] sm:$0xff]
        %v953 = vld [vmem:[%s941 + $0x58] sm:$0xff]
        %v954 = vld [vmem:[%s941 + $0x60] sm:$0xff]
        %v955 = vld [vmem:[%s941 + $0x68] sm:$0xff]
        %v956 = vld [vmem:[%s941 + $0x70] sm:$0xff]
        %v957 = vld [vmem:[%s941 + $0x78] sm:$0xff]
        %v958 = vld [vmem:[%s4 + $0x3] sm:$0x1]
        %v959 = vlaneseq
        %v960 = vshrl.u32 %v959, 7
        %v961 = vsub.s32 0, %v960
        %v962 = vrot.slane %v958, %v961
        %963 = vmatprep.subr.mxu0 0.0
        %964 = vmatpush1.msra.mxu0 %v957
        %965 = vmatprep.subr.mxu0 0.0
        %966 = vmatpush1.msra.mxu0 %v956
        %967 = vmatprep.subr.mxu0 0.0
        %968 = vmatpush1.msra.mxu0 %v955
        %969 = vmatprep.subr.mxu0 0.0
        %970 = vmatpush1.msra.mxu0 %v954
        %971 = vmatprep.subr.mxu0 0.0
        %972 = vmatpush1.msra.mxu0 %v953
        %973 = vmatprep.subr.mxu0 0.0
        %974 = vmatpush1.msra.mxu0 %v952
        %975 = vmatprep.subr.mxu0 0.0
        %976 = vmatpush1.msra.mxu0 %v951
        %977 = vmatprep.subr.mxu0 0.0
        %978 = vmatpush1.msra.mxu0 %v950
        %979 = vmatprep.subr.mxu0 0.0
        %980 = vmatpush1.msra.mxu0 %v949
        %981 = vmatprep.subr.mxu0 0.0
        %982 = vmatpush1.msra.mxu0 %v948
        %983 = vmatprep.subr.mxu0 0.0
        %984 = vmatpush1.msra.mxu0 %v947
        %985 = vmatprep.subr.mxu0 0.0
        %986 = vmatpush1.msra.mxu0 %v946
        %987 = vmatprep.subr.mxu0 0.0
        %988 = vmatpush1.msra.mxu0 %v945
        %989 = vmatprep.subr.mxu0 0.0
        %990 = vmatpush1.msra.mxu0 %v944
        %991 = vmatprep.subr.mxu0 0.0
        %992 = vmatpush1.msra.mxu0 %v943
        %993 = vmatprep.subr.mxu0 0.0
        %994 = vmatpush1.msra.mxu0 %v942
        %995 = vmatprep.subr.mxu0 0.0
        %996 = vmatpush2.msra.mxu0 0.0
        %997 = vmatprep.subr.mxu0 0.0
        %998 = vmatpush2.msra.mxu0 0.0
        %999 = vmatprep.subr.mxu0 0.0
        %1000 = vmatpush2.msra.mxu0 0.0
        %1001 = vmatprep.subr.mxu0 0.0
        %1002 = vmatpush2.msra.mxu0 0.0
        %1003 = vmatprep.subr.mxu0 0.0
        %1004 = vmatpush2.msra.mxu0 0.0
        %1005 = vmatprep.subr.mxu0 0.0
        %1006 = vmatpush2.msra.mxu0 0.0
        %1007 = vmatprep.subr.mxu0 0.0
        %1008 = vmatpush2.msra.mxu0 0.0
        %1009 = vmatprep.subr.mxu0 0.0
        %1010 = vmatpush2.msra.mxu0 0.0
        %1011 = vmatprep.subr.mxu0 0.0
        %1012 = vmatpush2.msra.mxu0 0.0
        %1013 = vmatprep.subr.mxu0 0.0
        %1014 = vmatpush2.msra.mxu0 0.0
        %1015 = vmatprep.subr.mxu0 0.0
        %1016 = vmatpush2.msra.mxu0 0.0
        %1017 = vmatprep.subr.mxu0 0.0
        %1018 = vmatpush2.msra.mxu0 0.0
        %1019 = vmatprep.subr.mxu0 0.0
        %1020 = vmatpush2.msra.mxu0 0.0
        %1021 = vmatprep.subr.mxu0 0.0
        %1022 = vmatpush2.msra.mxu0 0.0
        %1023 = vmatprep.subr.mxu0 0.0
        %1024 = vmatpush2.msra.mxu0 0.0
        %1025 = vmatprep.subr.mxu0 0.0
        %1026 = vmatpush2.msra.mxu0 0.0
        %1027 = vmatprep.mubr.f32.mxu0 0.0
        %1028 = vmatmul.mubr.f32.gmra.mxu0 %v925
        %v1029 = vpop.f32.mrf.mxu0
        %v1030 = vadd.f32 %v962, %v1029
        %v1031 = vpop.f32.mrf.mxu0
        %1032 = vmatprep.mubr.f32.mxu0 0.0
        %1033 = vmatmul.mubr.f32.gmra.mxu0 %v926
        %v1034 = vpop.f32.mrf.mxu0
        %v1035 = vadd.f32 %v962, %v1034
        %v1036 = vpop.f32.mrf.mxu0
        %1037 = vmatprep.mubr.f32.mxu0 0.0
        %1038 = vmatmul.mubr.f32.gmra.mxu0 %v927
        %v1039 = vpop.f32.mrf.mxu0
        %v1040 = vadd.f32 %v962, %v1039
        %v1041 = vpop.f32.mrf.mxu0
        %1042 = vmatprep.mubr.f32.mxu0 0.0
        %1043 = vmatmul.mubr.f32.gmra.mxu0 %v928
        %v1044 = vpop.f32.mrf.mxu0
        %v1045 = vadd.f32 %v962, %v1044
        %v1046 = vpop.f32.mrf.mxu0
        %1047 = vmatprep.mubr.f32.mxu0 0.0
        %1048 = vmatmul.mubr.f32.gmra.mxu0 %v929
        %v1049 = vpop.f32.mrf.mxu0
        %v1050 = vadd.f32 %v962, %v1049
        %v1051 = vpop.f32.mrf.mxu0
        %1052 = vmatprep.mubr.f32.mxu0 0.0
        %1053 = vmatmul.mubr.f32.gmra.mxu0 %v930
        %v1054 = vpop.f32.mrf.mxu0
        %v1055 = vadd.f32 %v962, %v1054
        %v1056 = vpop.f32.mrf.mxu0
        %1057 = vmatprep.mubr.f32.mxu0 0.0
        %1058 = vmatmul.mubr.f32.gmra.mxu0 %v931
        %v1059 = vpop.f32.mrf.mxu0
        %v1060 = vadd.f32 %v962, %v1059
        %v1061 = vpop.f32.mrf.mxu0
        %1062 = vmatprep.mubr.f32.mxu0 0.0
        %1063 = vmatmul.mubr.f32.gmra.mxu0 %v932
        %v1064 = vpop.f32.mrf.mxu0
        %v1065 = vadd.f32 %v962, %v1064
        %v1066 = vpop.f32.mrf.mxu0
        %1067 = vmatprep.mubr.f32.mxu0 0.0
        %1068 = vmatmul.mubr.f32.gmra.mxu0 %v933
        %v1069 = vpop.f32.mrf.mxu0
        %v1070 = vadd.f32 %v962, %v1069
        %v1071 = vpop.f32.mrf.mxu0
        %1072 = vmatprep.mubr.f32.mxu0 0.0
        %1073 = vmatmul.mubr.f32.gmra.mxu0 %v934
        %v1074 = vpop.f32.mrf.mxu0
        %v1075 = vadd.f32 %v962, %v1074
        %v1076 = vpop.f32.mrf.mxu0
        %1077 = vmatprep.mubr.f32.mxu0 0.0
        %1078 = vmatmul.mubr.f32.gmra.mxu0 %v935
        %v1079 = vpop.f32.mrf.mxu0
        %v1080 = vadd.f32 %v962, %v1079
        %v1081 = vpop.f32.mrf.mxu0
        %1082 = vmatprep.mubr.f32.mxu0 0.0
        %1083 = vmatmul.mubr.f32.gmra.mxu0 %v936
        %v1084 = vpop.f32.mrf.mxu0
        %v1085 = vadd.f32 %v962, %v1084
        %v1086 = vpop.f32.mrf.mxu0
        %1087 = vmatprep.mubr.f32.mxu0 0.0
        %1088 = vmatmul.mubr.f32.gmra.mxu0 %v937
        %v1089 = vpop.f32.mrf.mxu0
        %v1090 = vadd.f32 %v962, %v1089
        %v1091 = vpop.f32.mrf.mxu0
        %1092 = vmatprep.mubr.f32.mxu0 0.0
        %1093 = vmatmul.mubr.f32.gmra.mxu0 %v938
        %v1094 = vpop.f32.mrf.mxu0
        %v1095 = vadd.f32 %v962, %v1094
        %v1096 = vpop.f32.mrf.mxu0
        %1097 = vmatprep.mubr.f32.mxu0 0.0
        %1098 = vmatmul.mubr.f32.gmra.mxu0 %v939
        %v1099 = vpop.f32.mrf.mxu0
        %v1100 = vadd.f32 %v962, %v1099
        %v1101 = vpop.f32.mrf.mxu0
        %1102 = vmatprep.mubr.f32.mxu0 0.0
        %1103 = vmatmul.mubr.f32.gmra.mxu0 %v940
        %v1104 = vpop.f32.mrf.mxu0
        %v1105 = vadd.f32 %v962, %v1104
        %v1106 = vpop.f32.mrf.mxu0
        %1107 = vdwg.mxu0
        %1108 = vst [vmem:[%s219] sm:$0xff] %v1030
        %1109 = vst [vmem:[%s219 + $0x8] sm:$0xff] %v1035
        %1110 = vst [vmem:[%s219 + $0x10] sm:$0xff] %v1040
        %1111 = vst [vmem:[%s219 + $0x18] sm:$0xff] %v1045
        %1112 = vst [vmem:[%s219 + $0x20] sm:$0xff] %v1050
        %1113 = vst [vmem:[%s219 + $0x28] sm:$0xff] %v1055
        %1114 = vst [vmem:[%s219 + $0x30] sm:$0xff] %v1060
        %1115 = vst [vmem:[%s219 + $0x38] sm:$0xff] %v1065
        %1116 = vst [vmem:[%s219 + $0x40] sm:$0xff] %v1070
        %1117 = vst [vmem:[%s219 + $0x48] sm:$0xff] %v1075
        %1118 = vst [vmem:[%s219 + $0x50] sm:$0xff] %v1080
        %1119 = vst [vmem:[%s219 + $0x58] sm:$0xff] %v1085
        %1120 = vst [vmem:[%s219 + $0x60] sm:$0xff] %v1090
        %1121 = vst [vmem:[%s219 + $0x68] sm:$0xff] %v1095
        %1122 = vst [vmem:[%s219 + $0x70] sm:$0xff] %v1100
        %1123 = vst [vmem:[%s219 + $0x78] sm:$0xff] %v1105
        %s1124 = sand.u32 %s138, 1
        %s1125 = scalar_lea.sflag [#allocation4], %s1124
        %s1126 = sand.u32 %s138, 1
        %s1127 = smul.addr %s1126, 128
        %s1128 = scalar_lea.vmem [#allocation3], %s1127
        // Predicated region
        $region41: #{tpu_custom_call.1} parent=39 // pred_check
          %p1129 = pneg %p148
        $region42: #{tpu_custom_call.1} parent=39 // pred_check_branch
          %1131 = sbr.rel (%p1129) target = $region44
        $region43: #{tpu_custom_call.1} parent=39 // pred_region
          %s1132 = smul.u32 16, %s20
          %s1134 = ssub.s32 2048, 2048
          %1135 = vsyncadd %s1125, %s1134
          %s1136 = smul.addr %s1132, 128
          %s1137 = scalar_lea.hbm %s5, %s1136
          %s1138 = sshll.u32 %s1128, 4
          %s1139 = int_to_ptr.vmem [resolvable:$true] %s1138
          %1144 = dma.vmem_to_hbm [thread:$0]  %s1139, 2048, %s1137, %s1125, 128, 128, 8
        $region44: #{tpu_custom_call.1} parent=39 // pred_fallthru
          _
      $region40: #{tpu_custom_call.1} parent=5 // pred_fallthru
        _
      %p1145 = scmp.le.s32.totalorder 2, %s15
      // Predicated region
      $region45: #{tpu_custom_call.1} parent=5 // pred_check
        %p1146 = pneg %p1145
      $region46: #{tpu_custom_call.1} parent=5 // pred_check_branch
        %1148 = sbr.rel (%p1146) target = $region48
      $region47: #{tpu_custom_call.1} parent=5 // pred_region
        %s1149 = ssub.s32 %s15, 2
        // Predicated region
        $region49: #{tpu_custom_call.1} parent=47 // pred_check
          %p1150 = pneg %p154
        $region50: #{tpu_custom_call.1} parent=47 // pred_check_branch
          %1152 = sbr.rel (%p1150) target = $region52
        $region51: #{tpu_custom_call.1} parent=47 // pred_region
          %s1153 = sand.u32 %s139, 1
          %s1154 = scalar_lea.sflag [#allocation4], %s1153
          %s1155 = sand.u32 %s139, 1
          %s1156 = smul.addr %s1155, 128
          %s1157 = scalar_lea.vmem [#allocation3], %s1156
          %1158 = dma.done %s1154, 2048
        $region52: #{tpu_custom_call.1} parent=47 // pred_fallthru
          _
      $region48: #{tpu_custom_call.1} parent=5 // pred_fallthru
        _
    $region6: #{tpu_custom_call.1} parent=1 // loop_footer
      %s19 = sadd.s32 1, %s15
    $region7: #{tpu_custom_call.1} parent=1 // loop_footer_branch
      %14 = sbr.rel target = $region3
    $region8: #{tpu_custom_call.1} parent=1 // loop_exit
      _
    %1159 = vsyncpa [#allocation4], 1
    %s1160 = scalar_lea.sflag [#allocation4], 1
    %1161 = vsyncpa %s1160, 1

</llo_original>
